<compile_context>
chip_gen: v7x
topology: tpu7x:2x2x1
jax: 0.10.0
libtpu: 0.0.40
codegen_flags: <defaults>
</compile_context>

<pallas_src>
import jax
import jax.numpy as jnp
import numpy as np
from jax.experimental import pallas as pl
from jax.experimental.pallas import tpu as pltpu

SEQ_LEN = 30
FEAT = 51
INPUT_SIZE = (SEQ_LEN - 1) * FEAT      # 1479
HIDDEN = 40                            # num_hidden_state
LIN1 = 60
LIN2 = 50

# 4096 bf16 rows of x per tile ~= 11.6 MiB, double-buffered ~23 MiB, + ~1 MiB
# of resident weights/outputs -> fits the 48 MiB limit on v5e/v6e/v7x.
DEFAULT_TB = 4096
VMEM_LIMIT_BYTES = 48 << 20


def pred_lstm_kernel(x_ref, w_iog_ref, b_iog_ref, w12_ref, b12_ref, o_ref):
    """One batch tile: i/o/g gates (f-gate dropped, c0=0) + fused linear head."""
    x = x_ref[...]                                                  # (TB, 1479) bf16

    # gates = x @ W_iog^T + (b_ih + b_hh)[iog]   (h0 = 0 so W_hh term vanishes)
    gates = jnp.dot(x, w_iog_ref[...], preferred_element_type=jnp.float32)
    gates = gates + b_iog_ref[...]                                  # (TB, 120) f32

    # Packed gate order is [i, o, g]: one sigmoid sweep, one tanh sweep.
    sig = jax.nn.sigmoid(gates[:, :2 * HIDDEN])                     # (TB, 80)
    g_g = jnp.tanh(gates[:, 2 * HIDDEN:])                           # (TB, 40)
    i_g = sig[:, :HIDDEN]
    o_g = sig[:, HIDDEN:]

    # c = i*g (f*c0 == 0), h = o * tanh(c)
    h = o_g * jnp.tanh(i_g * g_g)                                   # (TB, 40) f32

    # Fused Linear(40->60)->Linear(60->50): y = h @ W12 + b12
    y = jnp.dot(h, w12_ref[...], preferred_element_type=jnp.float32) + b12_ref[...]

    o_ref[...] = y.astype(o_ref.dtype)                              # (TB, 50)


def _round_up(v, m):
    return ((v + m - 1) // m) * m


def _pick_tile(B, tb):
    """Batch tile: cap at tb, otherwise split in two (sublane-aligned) so the
    grid has >=2 programs for megacore sharding on v7x whenever possible."""
    if B > tb:
        return tb
    half = _round_up(pl.cdiv(B, 2), 8)
    return B if half >= B else half


def pred_lstm_forward(x, params, *, tb=DEFAULT_TB):
    """x: (B, 29, 51) f32.  Returns (B, 50) f32."""
    B = x.shape[0]
    # Flatten (glue, plain JAX) and cast the streamed operand to bf16.
    x_flat = x.reshape(B, INPUT_SIZE).astype(jnp.bfloat16)

    w_iog, b_iog, w12, b12 = params
    TB = _pick_tile(B, tb)
    grid = (pl.cdiv(B, TB),)

    return pl.pallas_call(
        pred_lstm_kernel,
        out_shape=jax.ShapeDtypeStruct((B, LIN2), jnp.float32),
        grid=grid,
        in_specs=[
            # x streams in batch tiles; weights pinned via constant index_maps.
            pl.BlockSpec((TB, INPUT_SIZE), lambda i: (i, 0)),
            pl.BlockSpec((INPUT_SIZE, 3 * HIDDEN), lambda i: (0, 0)),
            pl.BlockSpec((1, 3 * HIDDEN), lambda i: (0, 0)),
            pl.BlockSpec((HIDDEN, LIN2), lambda i: (0, 0)),
            pl.BlockSpec((1, LIN2), lambda i: (0, 0)),
        ],
        out_specs=pl.BlockSpec((TB, LIN2), lambda i: (i, 0)),
        compiler_params=pltpu.CompilerParams(
            dimension_semantics=("parallel",),
            vmem_limit_bytes=VMEM_LIMIT_BYTES,
        ),
    )(x_flat, w_iog, b_iog, w12, b12)


def init_raw_params(key):
    """PyTorch-layout parameters (for the reference and for packing)."""
    ks = jax.random.split(key, 8)
    scale_lstm = 1.0 / np.sqrt(HIDDEN)
    # nn.LSTM: weight_ih_l0 (4H, input), bias_ih_l0 (4H,), bias_hh_l0 (4H,)
    w_ih = jax.random.uniform(ks[0], (4 * HIDDEN, INPUT_SIZE), jnp.float32,
                              -scale_lstm, scale_lstm)
    b_ih = jax.random.uniform(ks[1], (4 * HIDDEN,), jnp.float32, -scale_lstm, scale_lstm)
    b_hh = jax.random.uniform(ks[2], (4 * HIDDEN,), jnp.float32, -scale_lstm, scale_lstm)
    # (weight_hh_l0 multiplies h0 == 0 for a length-1 sequence, so it drops out exactly)

    s1 = 1.0 / np.sqrt(HIDDEN)
    w1 = jax.random.uniform(ks[3], (LIN1, HIDDEN), jnp.float32, -s1, s1)   # (60, 40)
    b1 = jax.random.uniform(ks[4], (LIN1,), jnp.float32, -s1, s1)
    s2 = 1.0 / np.sqrt(LIN1)
    w2 = jax.random.uniform(ks[5], (LIN2, LIN1), jnp.float32, -s2, s2)     # (50, 60)
    b2 = jax.random.uniform(ks[6], (LIN2,), jnp.float32, -s2, s2)
    return w_ih, b_ih, b_hh, w1, b1, w2, b2


def pack_params(raw):
    """Host-side packing: drop f-gate, reorder to [i,o,g], bf16 gate weights,
    fuse the two Linear layers."""
    w_ih, b_ih, b_hh, w1, b1, w2, b2 = raw
    # PyTorch gate order along the 4H axis: [i, f, g, o]. Keep i, o, g (note
    # the [i, o, g] packing so the kernel runs one sigmoid over the first 2H).
    iog_rows = jnp.concatenate([
        w_ih[0 * HIDDEN:1 * HIDDEN],      # i
        w_ih[3 * HIDDEN:4 * HIDDEN],      # o
        w_ih[2 * HIDDEN:3 * HIDDEN],      # g
    ], axis=0)                            # (120, 1479)
    b_comb = b_ih + b_hh
    b_iog = jnp.concatenate([
        b_comb[0 * HIDDEN:1 * HIDDEN],
        b_comb[3 * HIDDEN:4 * HIDDEN],
        b_comb[2 * HIDDEN:3 * HIDDEN],
    ], axis=0)                            # (120,)

    # Fuse Linear(40->60) -> Linear(60->50):  y = (h @ W1^T + b1) @ W2^T + b2
    #                                           = h @ (W1^T @ W2^T) + (b1 @ W2^T + b2)
    w12 = w1.T @ w2.T                     # (40, 50)
    b12 = b1 @ w2.T + b2                  # (50,)

    return (
        iog_rows.T.astype(jnp.bfloat16),  # (1479, 120) bf16 (hot matmul operand)
        b_iog.reshape(1, 3 * HIDDEN),     # (1, 120) f32
        w12,                              # (40, 50) f32
        b12.reshape(1, LIN2),             # (1, 50) f32
    )


def reference_forward(x, raw):
    """Pure-JAX f32 reference of the full (unfused) PyTorch forward."""
    w_ih, b_ih, b_hh, w1, b1, w2, b2 = raw
    B = x.shape[0]
    xf = x.reshape(B, INPUT_SIZE)
    gates = xf @ w_ih.T + (b_ih + b_hh)               # h0 = 0 -> no W_hh term
    i_g = jax.nn.sigmoid(gates[:, 0 * HIDDEN:1 * HIDDEN])
    f_g = jax.nn.sigmoid(gates[:, 1 * HIDDEN:2 * HIDDEN])
    g_g = jnp.tanh(gates[:, 2 * HIDDEN:3 * HIDDEN])
    o_g = jax.nn.sigmoid(gates[:, 3 * HIDDEN:4 * HIDDEN])
    c = f_g * 0.0 + i_g * g_g                         # c0 = 0
    h = o_g * jnp.tanh(c)
    h1 = h @ w1.T + b1
    return h1 @ w2.T + b2


if __name__ == "__main__":
    key = jax.random.PRNGKey(0)
    k_x, k_x2, k_p = jax.random.split(key, 3)

    raw = init_raw_params(k_p)
    params = pack_params(raw)

    # Case 1: tiny batch (single full-extent block), as in the spec example.
    B = 2
    x = jax.random.normal(k_x, (B, SEQ_LEN - 1, FEAT), dtype=jnp.float32)
    out = jax.block_until_ready(pred_lstm_forward(x, params))
    ref = reference_forward(x, raw)
    assert out.shape == (B, LIN2), out.shape
    # bf16 inputs to the K=1479 contraction -> looser tolerance vs f32 reference.
    np.testing.assert_allclose(np.asarray(out), np.asarray(ref), rtol=2e-2, atol=2e-2)

    # Case 2: non-divisible batch -> 2-program grid with a masked partial tile
    # (exercises the megacore split path and partial-block output masking).
    B2 = 10
    x2 = jax.random.normal(k_x2, (B2, SEQ_LEN - 1, FEAT), dtype=jnp.float32)
    out2 = jax.block_until_ready(pred_lstm_forward(x2, params))
    ref2 = reference_forward(x2, raw)
    assert out2.shape == (B2, LIN2), out2.shape
    np.testing.assert_allclose(np.asarray(out2), np.asarray(ref2), rtol=2e-2, atol=2e-2)

    print("KERNEL_OK")
</pallas_src>

<mosaic_0001>
module attributes {stable_mosaic.version = 11 : i64} {
  func.func @pred_lstm_kernel(%arg0: i32, %arg1: memref<2x1479xbf16, #tpu.memory_space<vmem>>, %arg2: memref<1479x120xbf16, #tpu.memory_space<vmem>>, %arg3: memref<1x120xf32, #tpu.memory_space<vmem>>, %arg4: memref<40x50xf32, #tpu.memory_space<vmem>>, %arg5: memref<1x50xf32, #tpu.memory_space<vmem>>, %arg6: memref<2x50xf32, #tpu.memory_space<vmem>>) attributes {dimension_semantics = [#tpu.dimension_semantics<parallel>], iteration_bounds = array<i64: 1>, scalar_prefetch = 0 : i64, scratch_operands = 0 : i64, tpu.core_type = #tpu.core_type<tc>, window_params = [{transform_indices = @transform_0, window_bounds = array<i64: 2, 1479>}, {pipeline_mode = #tpu.pipeline_mode<synchronous>, transform_indices = @transform_1, window_bounds = array<i64: 1479, 120>}, {pipeline_mode = #tpu.pipeline_mode<synchronous>, transform_indices = @transform_2, window_bounds = array<i64: 1, 120>}, {pipeline_mode = #tpu.pipeline_mode<synchronous>, transform_indices = @transform_3, window_bounds = array<i64: 40, 50>}, {pipeline_mode = #tpu.pipeline_mode<synchronous>, transform_indices = @transform_4, window_bounds = array<i64: 1, 50>}, {transform_indices = @transform_5, window_bounds = array<i64: 2, 50>}]} {
    %c0 = arith.constant 0 : index
    %c0_0 = arith.constant 0 : index
    %0 = vector.load %arg1[%c0, %c0_0] : memref<2x1479xbf16, #tpu.memory_space<vmem>>, vector<2x1479xbf16>
    %c0_1 = arith.constant 0 : index
    %c0_2 = arith.constant 0 : index
    %1 = vector.load %arg2[%c0_1, %c0_2] : memref<1479x120xbf16, #tpu.memory_space<vmem>>, vector<1479x120xbf16>
    %cst = arith.constant dense<0.000000e+00> : vector<2x120xf32>
    %2 = tpu.matmul %0, %1, %cst {dimension_numbers = #tpu.dot_dimension_numbers<[1], [0], [0], [1], [0, 0, 1, 1], [], []>} : vector<2x1479xbf16>, vector<1479x120xbf16>, vector<2x120xf32> -> vector<2x120xf32>
    %c0_3 = arith.constant 0 : index
    %c0_4 = arith.constant 0 : index
    %3 = vector.load %arg3[%c0_3, %c0_4] : memref<1x120xf32, #tpu.memory_space<vmem>>, vector<1x120xf32>
    %4 = vector.broadcast %3 : vector<1x120xf32> to vector<2x120xf32>
    %5 = arith.addf %2, %4 : vector<2x120xf32>
    %6 = vector.extract_strided_slice %5 {offsets = [0, 0], sizes = [2, 80], strides = [1, 1]} : vector<2x120xf32> to vector<2x80xf32>
    %7 = arith.negf %6 : vector<2x80xf32>
    %8 = math.exp %7 : vector<2x80xf32>
    %cst_5 = arith.constant 1.000000e+00 : f32
    %9 = vector.broadcast %cst_5 : f32 to vector<2x80xf32>
    %10 = arith.addf %9, %8 : vector<2x80xf32>
    %11 = arith.divf %9, %10 : vector<2x80xf32>
    %12 = vector.extract_strided_slice %5 {offsets = [0, 80], sizes = [2, 40], strides = [1, 1]} : vector<2x120xf32> to vector<2x40xf32>
    %13 = math.tanh %12 : vector<2x40xf32>
    %14 = vector.extract_strided_slice %11 {offsets = [0, 0], sizes = [2, 40], strides = [1, 1]} : vector<2x80xf32> to vector<2x40xf32>
    %15 = vector.extract_strided_slice %11 {offsets = [0, 40], sizes = [2, 40], strides = [1, 1]} : vector<2x80xf32> to vector<2x40xf32>
    %16 = arith.mulf %14, %13 : vector<2x40xf32>
    %17 = math.tanh %16 : vector<2x40xf32>
    %18 = arith.mulf %15, %17 : vector<2x40xf32>
    %c0_6 = arith.constant 0 : index
    %c0_7 = arith.constant 0 : index
    %19 = vector.load %arg4[%c0_6, %c0_7] : memref<40x50xf32, #tpu.memory_space<vmem>>, vector<40x50xf32>
    %cst_8 = arith.constant dense<0.000000e+00> : vector<2x50xf32>
    %20 = tpu.matmul %18, %19, %cst_8 {dimension_numbers = #tpu.dot_dimension_numbers<[1], [0], [0], [1], [0, 0, 1, 1], [], []>} : vector<2x40xf32>, vector<40x50xf32>, vector<2x50xf32> -> vector<2x50xf32>
    %c0_9 = arith.constant 0 : index
    %c0_10 = arith.constant 0 : index
    %21 = vector.load %arg5[%c0_9, %c0_10] : memref<1x50xf32, #tpu.memory_space<vmem>>, vector<1x50xf32>
    %22 = vector.broadcast %21 : vector<1x50xf32> to vector<2x50xf32>
    %23 = arith.addf %20, %22 : vector<2x50xf32>
    %c0_11 = arith.constant 0 : index
    %c0_12 = arith.constant 0 : index
    %24 = vector.load %arg6[%c0_11, %c0_12] : memref<2x50xf32, #tpu.memory_space<vmem>>, vector<2x50xf32>
    tpu.vector_store %arg6[%c0_11, %c0_12], %23 {strides = array<i32>} : memref<2x50xf32, #tpu.memory_space<vmem>>, vector<2x50xf32>,
    return
  }
  func.func @transform_0(%arg0: i32) -> (i32, i32) {
    %c0_i32 = arith.constant 0 : i32
    %c0_i32_0 = arith.constant 0 : i32
    return %arg0, %c0_i32 : i32, i32
  }
  func.func @transform_1(%arg0: i32) -> (i32, i32) {
    %c0_i32 = arith.constant 0 : i32
    %c0_i32_0 = arith.constant 0 : i32
    %c0_i32_1 = arith.constant 0 : i32
    return %c0_i32, %c0_i32_0 : i32, i32
  }
  func.func @transform_2(%arg0: i32) -> (i32, i32) {
    %c0_i32 = arith.constant 0 : i32
    %c0_i32_0 = arith.constant 0 : i32
    %c0_i32_1 = arith.constant 0 : i32
    return %c0_i32, %c0_i32_0 : i32, i32
  }
  func.func @transform_3(%arg0: i32) -> (i32, i32) {
    %c0_i32 = arith.constant 0 : i32
    %c0_i32_0 = arith.constant 0 : i32
    %c0_i32_1 = arith.constant 0 : i32
    return %c0_i32, %c0_i32_0 : i32, i32
  }
  func.func @transform_4(%arg0: i32) -> (i32, i32) {
    %c0_i32 = arith.constant 0 : i32
    %c0_i32_0 = arith.constant 0 : i32
    %c0_i32_1 = arith.constant 0 : i32
    return %c0_i32, %c0_i32_0 : i32, i32
  }
  func.func @transform_5(%arg0: i32) -> (i32, i32) {
    %c0_i32 = arith.constant 0 : i32
    %c0_i32_0 = arith.constant 0 : i32
    return %arg0, %c0_i32 : i32, i32
  }
}

</mosaic_0001>

<llo_original>
// kernel: tpu_custom_call.1
$region0: #{tpu_custom_call.1}
  #allocation0 [shape = 'u32[]', space=smem, size = 0x4, offset = 0x4, fixed_abs, tag = 'smem constant byte address 0x4 - core index']
  #allocation1 [shape = 'u32[144,128]{1,0:T(1,128)}', space=vmem, size = 0x12000, scoped, tag = 'internal scratch']
  %s0 = inlined_call_operand.vmem [shape: bf16[2,1479], index: 0, kind: input, shape index: {}]
  %s1 = inlined_call_operand.vmem [shape: bf16[1479,120], index: 1, kind: input, shape index: {}]
  %s2 = inlined_call_operand.vmem [shape: f32[1,120], index: 2, kind: input, shape index: {}]
  %s3 = inlined_call_operand.vmem [shape: f32[40,50], index: 3, kind: input, shape index: {}]
  %s4 = inlined_call_operand.vmem [shape: f32[1,50], index: 4, kind: input, shape index: {}]
  %s5 = inlined_call_operand.hbm [shape: f32[2,50], index: 5, kind: output, shape index: {}]
  %s6 = sld [smem:[#allocation0]]
  $region30: #{tpu_custom_call.1} parent=0
    _
  %s8 = ssub.s32 1, %s6
  %s9 = scalar_select 0, %s8, %s6
  $region1: #{tpu_custom_call.1} parent=0
    #allocation2 [shape = 'u8[1024]{0}', space=vmem, size = 0x400, scoped, tag = 'output window, operand 0, single buffered']
    #allocation3 [shape = 's32[1]{0}', space=sflag, size = 0x4, scoped, tag = 'scoped memory for tpu_custom_call.1']
    %10 = vsyncpa [#allocation3], 0
    // Predicated region
    $region2: #{tpu_custom_call.1} parent=1 // pred_check
      _
    $region3: #{tpu_custom_call.1} parent=1 // pred_check_branch
      %12 = sbr.rel (0) target = $region5
    $region4: #{tpu_custom_call.1} parent=1 // pred_region
      _
    $region5: #{tpu_custom_call.1} parent=1 // pred_fallthru
      _
    // Predicated region
    $region6: #{tpu_custom_call.1} parent=1 // pred_check
      _
    $region7: #{tpu_custom_call.1} parent=1 // pred_check_branch
      %14 = sbr.rel (0) target = $region9
    $region8: #{tpu_custom_call.1} parent=1 // pred_region
      _
    $region9: #{tpu_custom_call.1} parent=1 // pred_fallthru
      _
    // Predicated region
    $region10: #{tpu_custom_call.1} parent=1 // pred_check
      _
    $region11: #{tpu_custom_call.1} parent=1 // pred_check_branch
      %16 = sbr.rel (0) target = $region13
    $region12: #{tpu_custom_call.1} parent=1 // pred_region
      _
    $region13: #{tpu_custom_call.1} parent=1 // pred_fallthru
      _
    // Predicated region
    $region14: #{tpu_custom_call.1} parent=1 // pred_check
      _
    $region15: #{tpu_custom_call.1} parent=1 // pred_check_branch
      %18 = sbr.rel (0) target = $region17
    $region16: #{tpu_custom_call.1} parent=1 // pred_region
      _
    $region17: #{tpu_custom_call.1} parent=1 // pred_fallthru
      _
    // Predicated region
    $region18: #{tpu_custom_call.1} parent=1 // pred_check
      _
    $region19: #{tpu_custom_call.1} parent=1 // pred_check_branch
      %20 = sbr.rel (0) target = $region21
    $region20: #{tpu_custom_call.1} parent=1 // pred_region
      _
    $region21: #{tpu_custom_call.1} parent=1 // pred_fallthru
      _
    %v22 = vld [vmem:[%s0] sm:$0xff]
    %v23 = vld [vmem:[%s0 + $0x8] sm:$0xf]
    %v24 = vld [vmem:[%s1] sm:$0xf]
    %v25 = vld [vmem:[%s1 + $0x4] sm:$0xf]
    %v26 = vld [vmem:[%s1 + $0x8] sm:$0xf]
    %v27 = vld [vmem:[%s1 + $0xc] sm:$0xf]
    %v28 = vld [vmem:[%s1 + $0x10] sm:$0xf]
    %v29 = vld [vmem:[%s1 + $0x14] sm:$0xf]
    %v30 = vld [vmem:[%s1 + $0x18] sm:$0xf]
    %v31 = vld [vmem:[%s1 + $0x1c] sm:$0xf]
    %v32 = vld [vmem:[%s1 + $0x20] sm:$0xf]
    %v33 = vld [vmem:[%s1 + $0x24] sm:$0xf]
    %v34 = vld [vmem:[%s1 + $0x28] sm:$0xf]
    %v35 = vld [vmem:[%s1 + $0x2c] sm:$0xf]
    %v36 = vld [vmem:[%s1 + $0x30] sm:$0xf]
    %v37 = vld [vmem:[%s1 + $0x34] sm:$0xf]
    %v38 = vld [vmem:[%s1 + $0x38] sm:$0xf]
    %v39 = vld [vmem:[%s1 + $0x3c] sm:$0xf]
    %v40 = vld [vmem:[%s1 + $0x40] sm:$0xf]
    %v41 = vld [vmem:[%s1 + $0x44] sm:$0xf]
    %v42 = vld [vmem:[%s1 + $0x48] sm:$0xf]
    %v43 = vld [vmem:[%s1 + $0x4c] sm:$0xf]
    %v44 = vld [vmem:[%s1 + $0x50] sm:$0xf]
    %v45 = vld [vmem:[%s1 + $0x54] sm:$0xf]
    %v46 = vld [vmem:[%s1 + $0x58] sm:$0xf]
    %v47 = vld [vmem:[%s1 + $0x5c] sm:$0xf]
    %v48 = vld [vmem:[%s1 + $0x60] sm:$0xf]
    %v49 = vld [vmem:[%s1 + $0x64] sm:$0xf]
    %v50 = vld [vmem:[%s1 + $0x68] sm:$0xf]
    %v51 = vld [vmem:[%s1 + $0x6c] sm:$0xf]
    %v52 = vld [vmem:[%s1 + $0x70] sm:$0xf]
    %v53 = vld [vmem:[%s1 + $0x74] sm:$0xf]
    %v54 = vld [vmem:[%s1 + $0x78] sm:$0xf]
    %v55 = vld [vmem:[%s1 + $0x7c] sm:$0xf]
    %v56 = vld [vmem:[%s1 + $0x80] sm:$0xf]
    %v57 = vld [vmem:[%s1 + $0x84] sm:$0xf]
    %v58 = vld [vmem:[%s1 + $0x88] sm:$0xf]
    %v59 = vld [vmem:[%s1 + $0x8c] sm:$0xf]
    %v60 = vld [vmem:[%s1 + $0x90] sm:$0xf]
    %v61 = vld [vmem:[%s1 + $0x94] sm:$0xf]
    %v62 = vld [vmem:[%s1 + $0x98] sm:$0xf]
    %v63 = vld [vmem:[%s1 + $0x9c] sm:$0xf]
    %v64 = vld [vmem:[%s1 + $0xa0] sm:$0xf]
    %v65 = vld [vmem:[%s1 + $0xa4] sm:$0xf]
    %v66 = vld [vmem:[%s1 + $0xa8] sm:$0xf]
    %v67 = vld [vmem:[%s1 + $0xac] sm:$0xf]
    %v68 = vld [vmem:[%s1 + $0xb0] sm:$0xf]
    %v69 = vld [vmem:[%s1 + $0xb4] sm:$0xf]
    %v70 = vld [vmem:[%s1 + $0xb8] sm:$0xf]
    %v71 = vld [vmem:[%s1 + $0xbc] sm:$0xf]
    %v72 = vld [vmem:[%s1 + $0xc0] sm:$0xf]
    %v73 = vld [vmem:[%s1 + $0xc4] sm:$0xf]
    %v74 = vld [vmem:[%s1 + $0xc8] sm:$0xf]
    %v75 = vld [vmem:[%s1 + $0xcc] sm:$0xf]
    %v76 = vld [vmem:[%s1 + $0xd0] sm:$0xf]
    %v77 = vld [vmem:[%s1 + $0xd4] sm:$0xf]
    %v78 = vld [vmem:[%s1 + $0xd8] sm:$0xf]
    %v79 = vld [vmem:[%s1 + $0xdc] sm:$0xf]
    %v80 = vld [vmem:[%s1 + $0xe0] sm:$0xf]
    %v81 = vld [vmem:[%s1 + $0xe4] sm:$0xf]
    %v82 = vld [vmem:[%s1 + $0xe8] sm:$0xf]
    %v83 = vld [vmem:[%s1 + $0xec] sm:$0xf]
    %v84 = vld [vmem:[%s1 + $0xf0] sm:$0xf]
    %v85 = vld [vmem:[%s1 + $0xf4] sm:$0xf]
    %v86 = vld [vmem:[%s1 + $0xf8] sm:$0xf]
    %v87 = vld [vmem:[%s1 + $0xfc] sm:$0xf]
    %v88 = vld [vmem:[%s1 + $0x100] sm:$0xf]
    %v89 = vld [vmem:[%s1 + $0x104] sm:$0xf]
    %v90 = vld [vmem:[%s1 + $0x108] sm:$0xf]
    %v91 = vld [vmem:[%s1 + $0x10c] sm:$0xf]
    %v92 = vld [vmem:[%s1 + $0x110] sm:$0xf]
    %v93 = vld [vmem:[%s1 + $0x114] sm:$0xf]
    %v94 = vld [vmem:[%s1 + $0x118] sm:$0xf]
    %v95 = vld [vmem:[%s1 + $0x11c] sm:$0xf]
    %v96 = vld [vmem:[%s1 + $0x120] sm:$0xf]
    %v97 = vld [vmem:[%s1 + $0x124] sm:$0xf]
    %v98 = vld [vmem:[%s1 + $0x128] sm:$0xf]
    %v99 = vld [vmem:[%s1 + $0x12c] sm:$0xf]
    %v100 = vld [vmem:[%s1 + $0x130] sm:$0xf]
    %v101 = vld [vmem:[%s1 + $0x134] sm:$0xf]
    %v102 = vld [vmem:[%s1 + $0x138] sm:$0xf]
    %v103 = vld [vmem:[%s1 + $0x13c] sm:$0xf]
    %v104 = vld [vmem:[%s1 + $0x140] sm:$0xf]
    %v105 = vld [vmem:[%s1 + $0x144] sm:$0xf]
    %v106 = vld [vmem:[%s1 + $0x148] sm:$0xf]
    %v107 = vld [vmem:[%s1 + $0x14c] sm:$0xf]
    %v108 = vld [vmem:[%s1 + $0x150] sm:$0xf]
    %v109 = vld [vmem:[%s1 + $0x154] sm:$0xf]
    %v110 = vld [vmem:[%s1 + $0x158] sm:$0xf]
    %v111 = vld [vmem:[%s1 + $0x15c] sm:$0xf]
    %v112 = vld [vmem:[%s1 + $0x160] sm:$0xf]
    %v113 = vld [vmem:[%s1 + $0x164] sm:$0xf]
    %v114 = vld [vmem:[%s1 + $0x168] sm:$0xf]
    %v115 = vld [vmem:[%s1 + $0x16c] sm:$0xf]
    %v116 = vld [vmem:[%s1 + $0x170] sm:$0xf]
    %v117 = vld [vmem:[%s1 + $0x174] sm:$0xf]
    %v118 = vld [vmem:[%s1 + $0x178] sm:$0xf]
    %v119 = vld [vmem:[%s1 + $0x17c] sm:$0xf]
    %v120 = vld [vmem:[%s1 + $0x180] sm:$0xf]
    %v121 = vld [vmem:[%s1 + $0x184] sm:$0xf]
    %v122 = vld [vmem:[%s1 + $0x188] sm:$0xf]
    %v123 = vld [vmem:[%s1 + $0x18c] sm:$0xf]
    %v124 = vld [vmem:[%s1 + $0x190] sm:$0xf]
    %v125 = vld [vmem:[%s1 + $0x194] sm:$0xf]
    %v126 = vld [vmem:[%s1 + $0x198] sm:$0xf]
    %v127 = vld [vmem:[%s1 + $0x19c] sm:$0xf]
    %v128 = vld [vmem:[%s1 + $0x1a0] sm:$0xf]
    %v129 = vld [vmem:[%s1 + $0x1a4] sm:$0xf]
    %v130 = vld [vmem:[%s1 + $0x1a8] sm:$0xf]
    %v131 = vld [vmem:[%s1 + $0x1ac] sm:$0xf]
    %v132 = vld [vmem:[%s1 + $0x1b0] sm:$0xf]
    %v133 = vld [vmem:[%s1 + $0x1b4] sm:$0xf]
    %v134 = vld [vmem:[%s1 + $0x1b8] sm:$0xf]
    %v135 = vld [vmem:[%s1 + $0x1bc] sm:$0xf]
    %v136 = vld [vmem:[%s1 + $0x1c0] sm:$0xf]
    %v137 = vld [vmem:[%s1 + $0x1c4] sm:$0xf]
    %v138 = vld [vmem:[%s1 + $0x1c8] sm:$0xf]
    %v139 = vld [vmem:[%s1 + $0x1cc] sm:$0xf]
    %v140 = vld [vmem:[%s1 + $0x1d0] sm:$0xf]
    %v141 = vld [vmem:[%s1 + $0x1d4] sm:$0xf]
    %v142 = vld [vmem:[%s1 + $0x1d8] sm:$0xf]
    %v143 = vld [vmem:[%s1 + $0x1dc] sm:$0xf]
    %v144 = vld [vmem:[%s1 + $0x1e0] sm:$0xf]
    %v145 = vld [vmem:[%s1 + $0x1e4] sm:$0xf]
    %v146 = vld [vmem:[%s1 + $0x1e8] sm:$0xf]
    %v147 = vld [vmem:[%s1 + $0x1ec] sm:$0xf]
    %v148 = vld [vmem:[%s1 + $0x1f0] sm:$0xf]
    %v149 = vld [vmem:[%s1 + $0x1f4] sm:$0xf]
    %v150 = vld [vmem:[%s1 + $0x1f8] sm:$0xf]
    %v151 = vld [vmem:[%s1 + $0x1fc] sm:$0xf]
    %v152 = vld [vmem:[%s1 + $0x200] sm:$0xf]
    %v153 = vld [vmem:[%s1 + $0x204] sm:$0xf]
    %v154 = vld [vmem:[%s1 + $0x208] sm:$0xf]
    %v155 = vld [vmem:[%s1 + $0x20c] sm:$0xf]
    %v156 = vld [vmem:[%s1 + $0x210] sm:$0xf]
    %v157 = vld [vmem:[%s1 + $0x214] sm:$0xf]
    %v158 = vld [vmem:[%s1 + $0x218] sm:$0xf]
    %v159 = vld [vmem:[%s1 + $0x21c] sm:$0xf]
    %v160 = vld [vmem:[%s1 + $0x220] sm:$0xf]
    %v161 = vld [vmem:[%s1 + $0x224] sm:$0xf]
    %v162 = vld [vmem:[%s1 + $0x228] sm:$0xf]
    %v163 = vld [vmem:[%s1 + $0x22c] sm:$0xf]
    %v164 = vld [vmem:[%s1 + $0x230] sm:$0xf]
    %v165 = vld [vmem:[%s1 + $0x234] sm:$0xf]
    %v166 = vld [vmem:[%s1 + $0x238] sm:$0xf]
    %v167 = vld [vmem:[%s1 + $0x23c] sm:$0xf]
    %v168 = vld [vmem:[%s1 + $0x240] sm:$0xf]
    %v169 = vld [vmem:[%s1 + $0x244] sm:$0xf]
    %v170 = vld [vmem:[%s1 + $0x248] sm:$0xf]
    %v171 = vld [vmem:[%s1 + $0x24c] sm:$0xf]
    %v172 = vld [vmem:[%s1 + $0x250] sm:$0xf]
    %v173 = vld [vmem:[%s1 + $0x254] sm:$0xf]
    %v174 = vld [vmem:[%s1 + $0x258] sm:$0xf]
    %v175 = vld [vmem:[%s1 + $0x25c] sm:$0xf]
    %v176 = vld [vmem:[%s1 + $0x260] sm:$0xf]
    %v177 = vld [vmem:[%s1 + $0x264] sm:$0xf]
    %v178 = vld [vmem:[%s1 + $0x268] sm:$0xf]
    %v179 = vld [vmem:[%s1 + $0x26c] sm:$0xf]
    %v180 = vld [vmem:[%s1 + $0x270] sm:$0xf]
    %v181 = vld [vmem:[%s1 + $0x274] sm:$0xf]
    %v182 = vld [vmem:[%s1 + $0x278] sm:$0xf]
    %v183 = vld [vmem:[%s1 + $0x27c] sm:$0xf]
    %v184 = vld [vmem:[%s1 + $0x280] sm:$0xf]
    %v185 = vld [vmem:[%s1 + $0x284] sm:$0xf]
    %v186 = vld [vmem:[%s1 + $0x288] sm:$0xf]
    %v187 = vld [vmem:[%s1 + $0x28c] sm:$0xf]
    %v188 = vld [vmem:[%s1 + $0x290] sm:$0xf]
    %v189 = vld [vmem:[%s1 + $0x294] sm:$0xf]
    %v190 = vld [vmem:[%s1 + $0x298] sm:$0xf]
    %v191 = vld [vmem:[%s1 + $0x29c] sm:$0xf]
    %v192 = vld [vmem:[%s1 + $0x2a0] sm:$0xf]
    %v193 = vld [vmem:[%s1 + $0x2a4] sm:$0xf]
    %v194 = vld [vmem:[%s1 + $0x2a8] sm:$0xf]
    %v195 = vld [vmem:[%s1 + $0x2ac] sm:$0xf]
    %v196 = vld [vmem:[%s1 + $0x2b0] sm:$0xf]
    %v197 = vld [vmem:[%s1 + $0x2b4] sm:$0xf]
    %v198 = vld [vmem:[%s1 + $0x2b8] sm:$0xf]
    %v199 = vld [vmem:[%s1 + $0x2bc] sm:$0xf]
    %v200 = vld [vmem:[%s1 + $0x2c0] sm:$0xf]
    %v201 = vld [vmem:[%s1 + $0x2c4] sm:$0xf]
    %v202 = vld [vmem:[%s1 + $0x2c8] sm:$0xf]
    %v203 = vld [vmem:[%s1 + $0x2cc] sm:$0xf]
    %v204 = vld [vmem:[%s1 + $0x2d0] sm:$0xf]
    %v205 = vld [vmem:[%s1 + $0x2d4] sm:$0xf]
    %v206 = vld [vmem:[%s1 + $0x2d8] sm:$0xf]
    %v207 = vld [vmem:[%s1 + $0x2dc] sm:$0xf]
    %v208 = vld [vmem:[%s1 + $0x2e0] sm:$0xf]
    %v209 = vld [vmem:[%s2] sm:$0x1]
    %v211 = vlaneseq
    %v212 = vshrl.u32 %v211, 7
    %v213 = vsub.s32 0, %v212
    %v214 = vrot.slane %v209, %v213
    %v218 = vcombine.high %v22, %v22
    %v220 = vunpack.c.l.s4 1966171168
    %v221 = vunpack.c.0.s8 %v220
    %v222 = vlaneseq
    %v223 = vshrl.u32 %v222, 7
    %v224 = vsub.s32 %v221, %v223
    %v225 = vrot.slane %v22, %v224
    %v227 = vunpack.c.l.s4 1966171168
    %v228 = vunpack.c.0.s8 %v227
    %v229 = vlaneseq
    %v230 = vshrl.u32 %v229, 7
    %v231 = vsub.s32 %v228, %v230
    %v232 = vrot.slane %v218, %v231
    %v233 = vcombine.high %v225, %v225
    %v234 = vcombine.high %v232, %v232
    %v236 = vunpack.c.l.s4 1966171168
    %v237 = vunpack.c.0.s8 %v236
    %v238 = vlaneseq
    %v239 = vshrl.u32 %v238, 7
    %v240 = vsub.s32 %v237, %v239
    %v241 = vrot.slane %v225, %v240
    %v243 = vunpack.c.l.s4 1966171168
    %v244 = vunpack.c.0.s8 %v243
    %v245 = vlaneseq
    %v246 = vshrl.u32 %v245, 7
    %v247 = vsub.s32 %v244, %v246
    %v248 = vrot.slane %v232, %v247
    %v250 = vunpack.c.l.s4 1966171168
    %v251 = vunpack.c.0.s8 %v250
    %v252 = vlaneseq
    %v253 = vshrl.u32 %v252, 7
    %v254 = vsub.s32 %v251, %v253
    %v255 = vrot.slane %v233, %v254
    %v257 = vunpack.c.l.s4 1966171168
    %v258 = vunpack.c.0.s8 %v257
    %v259 = vlaneseq
    %v260 = vshrl.u32 %v259, 7
    %v261 = vsub.s32 %v258, %v260
    %v262 = vrot.slane %v234, %v261
    %v263 = vcombine.high %v241, %v241
    %v264 = vcombine.high %v248, %v248
    %v265 = vcombine.high %v255, %v255
    %v266 = vcombine.high %v262, %v262
    %v268 = vunpack.c.l.s4 1966171168
    %v269 = vunpack.c.0.s8 %v268
    %v270 = vlaneseq
    %v271 = vshrl.u32 %v270, 7
    %v272 = vsub.s32 %v269, %v271
    %v273 = vrot.slane %v23, %v272
    %v274 = vcombine.high %v273, %v273
    %v276 = vunpack.c.l.s4 1966171168
    %v277 = vunpack.c.0.s8 %v276
    %v278 = vlaneseq
    %v279 = vshrl.u32 %v278, 7
    %v280 = vsub.s32 %v277, %v279
    %v281 = vrot.slane %v273, %v280
    %v283 = vunpack.c.l.s4 1966171168
    %v284 = vunpack.c.0.s8 %v283
    %v285 = vlaneseq
    %v286 = vshrl.u32 %v285, 7
    %v287 = vsub.s32 %v284, %v286
    %v288 = vrot.slane %v274, %v287
    %v289 = vcombine.high %v281, %v281
    %v290 = vcombine.high %v288, %v288
    %v487 = vunpack.c.l.b16 %v24
    %v488 = vunpack.c.l.b16 %v25
    %v489 = vunpack.c.l.b16 %v26
    %v490 = vunpack.c.l.b16 %v27
    %v491 = vunpack.c.l.b16 %v28
    %v492 = vunpack.c.l.b16 %v29
    %v493 = vunpack.c.l.b16 %v30
    %v494 = vunpack.c.l.b16 %v31
    %v495 = vunpack.c.l.b16 %v32
    %v496 = vunpack.c.l.b16 %v33
    %v497 = vunpack.c.l.b16 %v34
    %v498 = vunpack.c.l.b16 %v35
    %v499 = vunpack.c.l.b16 %v36
    %v500 = vunpack.c.l.b16 %v37
    %v501 = vunpack.c.l.b16 %v38
    %v502 = vunpack.c.l.b16 %v39
    %v503 = vunpack.c.l.b16 %v40
    %v504 = vunpack.c.l.b16 %v41
    %v505 = vunpack.c.l.b16 %v42
    %v506 = vunpack.c.l.b16 %v43
    %v507 = vunpack.c.l.b16 %v44
    %v508 = vunpack.c.l.b16 %v45
    %v509 = vunpack.c.l.b16 %v46
    %v510 = vunpack.c.l.b16 %v47
    %v511 = vunpack.c.l.b16 %v48
    %v512 = vunpack.c.l.b16 %v49
    %v513 = vunpack.c.l.b16 %v50
    %v514 = vunpack.c.l.b16 %v51
    %v515 = vunpack.c.l.b16 %v52
    %v516 = vunpack.c.l.b16 %v53
    %v517 = vunpack.c.l.b16 %v54
    %v518 = vunpack.c.l.b16 %v55
    %v519 = vunpack.c.l.b16 %v56
    %v520 = vunpack.c.l.b16 %v57
    %v521 = vunpack.c.l.b16 %v58
    %v522 = vunpack.c.l.b16 %v59
    %v523 = vunpack.c.l.b16 %v60
    %v524 = vunpack.c.l.b16 %v61
    %v525 = vunpack.c.l.b16 %v62
    %v526 = vunpack.c.l.b16 %v63
    %v527 = vunpack.c.l.b16 %v64
    %v528 = vunpack.c.l.b16 %v65
    %v529 = vunpack.c.l.b16 %v66
    %v530 = vunpack.c.l.b16 %v67
    %v531 = vunpack.c.l.b16 %v68
    %v532 = vunpack.c.l.b16 %v69
    %v533 = vunpack.c.l.b16 %v70
    %v534 = vunpack.c.l.b16 %v71
    %v535 = vunpack.c.l.b16 %v72
    %v536 = vunpack.c.l.b16 %v73
    %v537 = vunpack.c.l.b16 %v74
    %v538 = vunpack.c.l.b16 %v75
    %v539 = vunpack.c.l.b16 %v76
    %v540 = vunpack.c.l.b16 %v77
    %v541 = vunpack.c.l.b16 %v78
    %v542 = vunpack.c.l.b16 %v79
    %v543 = vunpack.c.l.b16 %v80
    %v544 = vunpack.c.l.b16 %v81
    %v545 = vunpack.c.l.b16 %v82
    %v546 = vunpack.c.l.b16 %v83
    %v547 = vunpack.c.l.b16 %v84
    %v548 = vunpack.c.l.b16 %v85
    %v549 = vunpack.c.l.b16 %v86
    %v550 = vunpack.c.l.b16 %v87
    %v551 = vunpack.c.l.b16 %v88
    %v552 = vunpack.c.l.b16 %v89
    %v553 = vunpack.c.l.b16 %v90
    %v554 = vunpack.c.l.b16 %v91
    %v555 = vunpack.c.l.b16 %v92
    %v556 = vunpack.c.l.b16 %v93
    %v557 = vunpack.c.l.b16 %v94
    %v558 = vunpack.c.l.b16 %v95
    %v559 = vunpack.c.l.b16 %v96
    %v560 = vunpack.c.l.b16 %v97
    %v561 = vunpack.c.l.b16 %v98
    %v562 = vunpack.c.l.b16 %v99
    %v563 = vunpack.c.l.b16 %v100
    %v564 = vunpack.c.l.b16 %v101
    %v565 = vunpack.c.l.b16 %v102
    %v566 = vunpack.c.l.b16 %v103
    %v567 = vunpack.c.l.b16 %v104
    %v568 = vunpack.c.l.b16 %v105
    %v569 = vunpack.c.l.b16 %v106
    %v570 = vunpack.c.l.b16 %v107
    %v571 = vunpack.c.l.b16 %v108
    %v572 = vunpack.c.l.b16 %v109
    %v573 = vunpack.c.l.b16 %v110
    %v574 = vunpack.c.l.b16 %v111
    %v575 = vunpack.c.l.b16 %v112
    %v576 = vunpack.c.l.b16 %v113
    %v577 = vunpack.c.l.b16 %v114
    %v578 = vunpack.c.l.b16 %v115
    %v579 = vunpack.c.l.b16 %v116
    %v580 = vunpack.c.l.b16 %v117
    %v581 = vunpack.c.l.b16 %v118
    %v582 = vunpack.c.l.b16 %v119
    %v583 = vunpack.c.l.b16 %v120
    %v584 = vunpack.c.l.b16 %v121
    %v585 = vunpack.c.l.b16 %v122
    %v586 = vunpack.c.l.b16 %v123
    %v587 = vunpack.c.l.b16 %v124
    %v588 = vunpack.c.l.b16 %v125
    %v589 = vunpack.c.l.b16 %v126
    %v590 = vunpack.c.l.b16 %v127
    %v591 = vunpack.c.l.b16 %v128
    %v592 = vunpack.c.l.b16 %v129
    %v593 = vunpack.c.l.b16 %v130
    %v594 = vunpack.c.l.b16 %v131
    %v595 = vunpack.c.l.b16 %v132
    %v596 = vunpack.c.l.b16 %v133
    %v597 = vunpack.c.l.b16 %v134
    %v598 = vunpack.c.l.b16 %v135
    %v599 = vunpack.c.l.b16 %v136
    %v600 = vunpack.c.l.b16 %v137
    %v601 = vunpack.c.l.b16 %v138
    %v602 = vunpack.c.l.b16 %v139
    %v603 = vunpack.c.l.b16 %v140
    %v604 = vunpack.c.l.b16 %v141
    %v605 = vunpack.c.l.b16 %v142
    %v606 = vunpack.c.l.b16 %v143
    %v607 = vunpack.c.l.b16 %v144
    %v608 = vunpack.c.l.b16 %v145
    %v609 = vunpack.c.l.b16 %v146
    %v610 = vunpack.c.l.b16 %v147
    %v611 = vunpack.c.l.b16 %v148
    %v612 = vunpack.c.l.b16 %v149
    %v613 = vunpack.c.l.b16 %v150
    %v614 = vunpack.c.l.b16 %v151
    %v615 = vunpack.c.l.b16 %v152
    %v616 = vunpack.c.l.b16 %v153
    %v617 = vunpack.c.l.b16 %v154
    %v618 = vunpack.c.l.b16 %v155
    %v619 = vunpack.c.l.b16 %v156
    %v620 = vunpack.c.l.b16 %v157
    %v621 = vunpack.c.l.b16 %v158
    %v622 = vunpack.c.l.b16 %v159
    %v623 = vunpack.c.l.b16 %v160
    %v624 = vunpack.c.l.b16 %v161
    %v625 = vunpack.c.l.b16 %v162
    %v626 = vunpack.c.l.b16 %v163
    %v627 = vunpack.c.l.b16 %v164
    %v628 = vunpack.c.l.b16 %v165
    %v629 = vunpack.c.l.b16 %v166
    %v630 = vunpack.c.l.b16 %v167
    %v631 = vunpack.c.l.b16 %v168
    %v632 = vunpack.c.l.b16 %v169
    %v633 = vunpack.c.l.b16 %v170
    %v634 = vunpack.c.l.b16 %v171
    %v635 = vunpack.c.l.b16 %v172
    %v636 = vunpack.c.l.b16 %v173
    %v637 = vunpack.c.l.b16 %v174
    %v638 = vunpack.c.l.b16 %v175
    %v639 = vunpack.c.l.b16 %v176
    %v640 = vunpack.c.l.b16 %v177
    %v641 = vunpack.c.l.b16 %v178
    %v642 = vunpack.c.l.b16 %v179
    %v643 = vunpack.c.l.b16 %v180
    %v644 = vunpack.c.l.b16 %v181
    %v645 = vunpack.c.l.b16 %v182
    %v646 = vunpack.c.l.b16 %v183
    %v647 = vunpack.c.l.b16 %v184
    %v648 = vunpack.c.l.b16 %v185
    %v649 = vunpack.c.l.b16 %v186
    %v650 = vunpack.c.l.b16 %v187
    %v651 = vunpack.c.l.b16 %v188
    %v652 = vunpack.c.l.b16 %v189
    %v653 = vunpack.c.l.b16 %v190
    %v654 = vunpack.c.l.b16 %v191
    %v655 = vunpack.c.l.b16 %v192
    %v656 = vunpack.c.l.b16 %v193
    %v657 = vunpack.c.l.b16 %v194
    %v658 = vunpack.c.l.b16 %v195
    %v659 = vunpack.c.l.b16 %v196
    %v660 = vunpack.c.l.b16 %v197
    %v661 = vunpack.c.l.b16 %v198
    %v662 = vunpack.c.l.b16 %v199
    %v663 = vunpack.c.l.b16 %v200
    %v664 = vunpack.c.l.b16 %v201
    %v665 = vunpack.c.l.b16 %v202
    %v666 = vunpack.c.l.b16 %v203
    %v667 = vunpack.c.l.b16 %v204
    %v668 = vunpack.c.l.b16 %v205
    %v669 = vunpack.c.l.b16 %v206
    %v670 = vunpack.c.l.b16 %v207
    %v671 = vunpack.c.l.b16 %v208
    %v672 = vpack.c.b16 %v488, %v487
    %v673 = vpack.c.b16 %v490, %v489
    %v674 = vpack.c.b16 %v492, %v491
    %v675 = vpack.c.b16 %v494, %v493
    %v676 = vpack.c.b16 %v496, %v495
    %v677 = vpack.c.b16 %v498, %v497
    %v678 = vpack.c.b16 %v500, %v499
    %v679 = vpack.c.b16 %v502, %v501
    %v680 = vpack.c.b16 %v504, %v503
    %v681 = vpack.c.b16 %v506, %v505
    %v682 = vpack.c.b16 %v508, %v507
    %v683 = vpack.c.b16 %v510, %v509
    %v684 = vpack.c.b16 %v512, %v511
    %v685 = vpack.c.b16 %v514, %v513
    %v686 = vpack.c.b16 %v516, %v515
    %v687 = vpack.c.b16 %v518, %v517
    %v688 = vpack.c.b16 %v520, %v519
    %v689 = vpack.c.b16 %v522, %v521
    %v690 = vpack.c.b16 %v524, %v523
    %v691 = vpack.c.b16 %v526, %v525
    %v692 = vpack.c.b16 %v528, %v527
    %v693 = vpack.c.b16 %v530, %v529
    %v694 = vpack.c.b16 %v532, %v531
    %v695 = vpack.c.b16 %v534, %v533
    %v696 = vpack.c.b16 %v536, %v535
    %v697 = vpack.c.b16 %v538, %v537
    %v698 = vpack.c.b16 %v540, %v539
    %v699 = vpack.c.b16 %v542, %v541
    %v700 = vpack.c.b16 %v544, %v543
    %v701 = vpack.c.b16 %v546, %v545
    %v702 = vpack.c.b16 %v548, %v547
    %v703 = vpack.c.b16 %v550, %v549
    %v704 = vpack.c.b16 %v552, %v551
    %v705 = vpack.c.b16 %v554, %v553
    %v706 = vpack.c.b16 %v556, %v555
    %v707 = vpack.c.b16 %v558, %v557
    %v708 = vpack.c.b16 %v560, %v559
    %v709 = vpack.c.b16 %v562, %v561
    %v710 = vpack.c.b16 %v564, %v563
    %v711 = vpack.c.b16 %v566, %v565
    %v712 = vpack.c.b16 %v568, %v567
    %v713 = vpack.c.b16 %v570, %v569
    %v714 = vpack.c.b16 %v572, %v571
    %v715 = vpack.c.b16 %v574, %v573
    %v716 = vpack.c.b16 %v576, %v575
    %v717 = vpack.c.b16 %v578, %v577
    %v718 = vpack.c.b16 %v580, %v579
    %v719 = vpack.c.b16 %v582, %v581
    %v720 = vpack.c.b16 %v584, %v583
    %v721 = vpack.c.b16 %v586, %v585
    %v722 = vpack.c.b16 %v588, %v587
    %v723 = vpack.c.b16 %v590, %v589
    %v724 = vpack.c.b16 %v592, %v591
    %v725 = vpack.c.b16 %v594, %v593
    %v726 = vpack.c.b16 %v596, %v595
    %v727 = vpack.c.b16 %v598, %v597
    %v728 = vpack.c.b16 %v600, %v599
    %v729 = vpack.c.b16 %v602, %v601
    %v730 = vpack.c.b16 %v604, %v603
    %v731 = vpack.c.b16 %v606, %v605
    %v732 = vpack.c.b16 %v608, %v607
    %v733 = vpack.c.b16 %v610, %v609
    %v734 = vpack.c.b16 %v612, %v611
    %v735 = vpack.c.b16 %v614, %v613
    %v736 = vpack.c.b16 %v616, %v615
    %v737 = vpack.c.b16 %v618, %v617
    %v738 = vpack.c.b16 %v620, %v619
    %v739 = vpack.c.b16 %v622, %v621
    %v740 = vpack.c.b16 %v624, %v623
    %v741 = vpack.c.b16 %v626, %v625
    %v742 = vpack.c.b16 %v628, %v627
    %v743 = vpack.c.b16 %v630, %v629
    %v744 = vpack.c.b16 %v632, %v631
    %v745 = vpack.c.b16 %v634, %v633
    %v746 = vpack.c.b16 %v636, %v635
    %v747 = vpack.c.b16 %v638, %v637
    %v748 = vpack.c.b16 %v640, %v639
    %v749 = vpack.c.b16 %v642, %v641
    %v750 = vpack.c.b16 %v644, %v643
    %v751 = vpack.c.b16 %v646, %v645
    %v752 = vpack.c.b16 %v648, %v647
    %v753 = vpack.c.b16 %v650, %v649
    %v754 = vpack.c.b16 %v652, %v651
    %v755 = vpack.c.b16 %v654, %v653
    %v756 = vpack.c.b16 %v656, %v655
    %v757 = vpack.c.b16 %v658, %v657
    %v758 = vpack.c.b16 %v660, %v659
    %v759 = vpack.c.b16 %v662, %v661
    %v760 = vpack.c.b16 %v664, %v663
    %v761 = vpack.c.b16 %v666, %v665
    %v762 = vpack.c.b16 %v668, %v667
    %v763 = vpack.c.b16 %v670, %v669
    %v764 = vpack.c.b16 %v671, %v671
    %vm857 = vcmask 580608
    %v859 = vsel %vm857, %v290, 0
    %vm861 = vcmask 1042432
    %vm862 = vcmask 1043456
    %v863 = vsel %vm861, 4294967295, 65535
    %v864 = vsel %vm862, %v863, 0
    %v866 = vand.u32 %v764, %v864
    %868 = vmatprep.subr.bf16.mxu0 0
    %869 = vmatpush1.bf16.msra.mxu0 %v672
    %870 = vmatprep.subr.bf16.mxu0 0
    %871 = vmatpush1.bf16.msra.mxu0 %v673
    %872 = vmatprep.subr.bf16.mxu0 0
    %873 = vmatpush1.bf16.msra.mxu0 %v674
    %874 = vmatprep.subr.bf16.mxu0 0
    %875 = vmatpush1.bf16.msra.mxu0 %v675
    %876 = vmatprep.subr.bf16.mxu0 0
    %877 = vmatpush1.bf16.msra.mxu0 %v676
    %878 = vmatprep.subr.bf16.mxu0 0
    %879 = vmatpush1.bf16.msra.mxu0 %v677
    %880 = vmatprep.subr.bf16.mxu0 0
    %881 = vmatpush1.bf16.msra.mxu0 %v678
    %882 = vmatprep.subr.bf16.mxu0 0
    %883 = vmatpush1.bf16.msra.mxu0 %v679
    %884 = vmatprep.subr.bf16.mxu0 0
    %885 = vmatpush1.bf16.msra.mxu0 %v680
    %886 = vmatprep.subr.bf16.mxu0 0
    %887 = vmatpush1.bf16.msra.mxu0 %v681
    %888 = vmatprep.subr.bf16.mxu0 0
    %889 = vmatpush1.bf16.msra.mxu0 %v682
    %890 = vmatprep.subr.bf16.mxu0 0
    %891 = vmatpush1.bf16.msra.mxu0 %v683
    %892 = vmatprep.subr.bf16.mxu0 0
    %893 = vmatpush1.bf16.msra.mxu0 %v684
    %894 = vmatprep.subr.bf16.mxu0 0
    %895 = vmatpush1.bf16.msra.mxu0 %v685
    %896 = vmatprep.subr.bf16.mxu0 0
    %897 = vmatpush1.bf16.msra.mxu0 %v686
    %898 = vmatprep.subr.bf16.mxu0 0
    %899 = vmatpush1.bf16.msra.mxu0 %v687
    %900 = vmatprep.mubr.bf16.mxu0 %v255
    %901 = vmatmul.mubr.bf16.gmra.mrb[0].mxu0 %v241
    %v902 = vpop.f32.mrb[0].mxu0
    %v903 = vadd.f32 %v214, %v902
    %v904 = vpop.f32.mrb[0].mxu0
    %v905 = vpop.f32.mrb[0].mxu0
    %v906 = vpop.f32.mrb[0].mxu0
    %907 = vdwg.mxu0
    %908 = vmatprep.subr.bf16.mxu0 0
    %909 = vmatpush1.bf16.msra.mxu0 %v688
    %910 = vmatprep.subr.bf16.mxu0 0
    %911 = vmatpush1.bf16.msra.mxu0 %v689
    %912 = vmatprep.subr.bf16.mxu0 0
    %913 = vmatpush1.bf16.msra.mxu0 %v690
    %914 = vmatprep.subr.bf16.mxu0 0
    %915 = vmatpush1.bf16.msra.mxu0 %v691
    %916 = vmatprep.subr.bf16.mxu0 0
    %917 = vmatpush1.bf16.msra.mxu0 %v692
    %918 = vmatprep.subr.bf16.mxu0 0
    %919 = vmatpush1.bf16.msra.mxu0 %v693
    %920 = vmatprep.subr.bf16.mxu0 0
    %921 = vmatpush1.bf16.msra.mxu0 %v694
    %922 = vmatprep.subr.bf16.mxu0 0
    %923 = vmatpush1.bf16.msra.mxu0 %v695
    %924 = vmatprep.subr.bf16.mxu0 0
    %925 = vmatpush1.bf16.msra.mxu0 %v696
    %926 = vmatprep.subr.bf16.mxu0 0
    %927 = vmatpush1.bf16.msra.mxu0 %v697
    %928 = vmatprep.subr.bf16.mxu0 0
    %929 = vmatpush1.bf16.msra.mxu0 %v698
    %930 = vmatprep.subr.bf16.mxu0 0
    %931 = vmatpush1.bf16.msra.mxu0 %v699
    %932 = vmatprep.subr.bf16.mxu0 0
    %933 = vmatpush1.bf16.msra.mxu0 %v700
    %934 = vmatprep.subr.bf16.mxu0 0
    %935 = vmatpush1.bf16.msra.mxu0 %v701
    %936 = vmatprep.subr.bf16.mxu0 0
    %937 = vmatpush1.bf16.msra.mxu0 %v702
    %938 = vmatprep.subr.bf16.mxu0 0
    %939 = vmatpush1.bf16.msra.mxu0 %v703
    %940 = vmatprep.mubr.bf16.mxu0 %v265
    %941 = vmatmul.mubr.bf16.gmra.mrb[0].mxu0 %v263
    %v942 = vpop.f32.mrb[0].mxu0
    %v943 = vadd.f32 %v903, %v942
    %v944 = vpop.f32.mrb[0].mxu0
    %v945 = vpop.f32.mrb[0].mxu0
    %v946 = vpop.f32.mrb[0].mxu0
    %947 = vdwg.mxu0
    %948 = vmatprep.subr.bf16.mxu0 0
    %949 = vmatpush1.bf16.msra.mxu0 %v704
    %950 = vmatprep.subr.bf16.mxu0 0
    %951 = vmatpush1.bf16.msra.mxu0 %v705
    %952 = vmatprep.subr.bf16.mxu0 0
    %953 = vmatpush1.bf16.msra.mxu0 %v706
    %954 = vmatprep.subr.bf16.mxu0 0
    %955 = vmatpush1.bf16.msra.mxu0 %v707
    %956 = vmatprep.subr.bf16.mxu0 0
    %957 = vmatpush1.bf16.msra.mxu0 %v708
    %958 = vmatprep.subr.bf16.mxu0 0
    %959 = vmatpush1.bf16.msra.mxu0 %v709
    %960 = vmatprep.subr.bf16.mxu0 0
    %961 = vmatpush1.bf16.msra.mxu0 %v710
    %962 = vmatprep.subr.bf16.mxu0 0
    %963 = vmatpush1.bf16.msra.mxu0 %v711
    %964 = vmatprep.subr.bf16.mxu0 0
    %965 = vmatpush1.bf16.msra.mxu0 %v712
    %966 = vmatprep.subr.bf16.mxu0 0
    %967 = vmatpush1.bf16.msra.mxu0 %v713
    %968 = vmatprep.subr.bf16.mxu0 0
    %969 = vmatpush1.bf16.msra.mxu0 %v714
    %970 = vmatprep.subr.bf16.mxu0 0
    %971 = vmatpush1.bf16.msra.mxu0 %v715
    %972 = vmatprep.subr.bf16.mxu0 0
    %973 = vmatpush1.bf16.msra.mxu0 %v716
    %974 = vmatprep.subr.bf16.mxu0 0
    %975 = vmatpush1.bf16.msra.mxu0 %v717
    %976 = vmatprep.subr.bf16.mxu0 0
    %977 = vmatpush1.bf16.msra.mxu0 %v718
    %978 = vmatprep.subr.bf16.mxu0 0
    %979 = vmatpush1.bf16.msra.mxu0 %v719
    %980 = vmatprep.mubr.bf16.mxu0 %v262
    %981 = vmatmul.mubr.bf16.gmra.mrb[0].mxu0 %v248
    %v982 = vpop.f32.mrb[0].mxu0
    %v983 = vadd.f32 %v943, %v982
    %v984 = vpop.f32.mrb[0].mxu0
    %v985 = vpop.f32.mrb[0].mxu0
    %v986 = vpop.f32.mrb[0].mxu0
    %987 = vdwg.mxu0
    %988 = vmatprep.subr.bf16.mxu0 0
    %989 = vmatpush1.bf16.msra.mxu0 %v720
    %990 = vmatprep.subr.bf16.mxu0 0
    %991 = vmatpush1.bf16.msra.mxu0 %v721
    %992 = vmatprep.subr.bf16.mxu0 0
    %993 = vmatpush1.bf16.msra.mxu0 %v722
    %994 = vmatprep.subr.bf16.mxu0 0
    %995 = vmatpush1.bf16.msra.mxu0 %v723
    %996 = vmatprep.subr.bf16.mxu0 0
    %997 = vmatpush1.bf16.msra.mxu0 %v724
    %998 = vmatprep.subr.bf16.mxu0 0
    %999 = vmatpush1.bf16.msra.mxu0 %v725
    %1000 = vmatprep.subr.bf16.mxu0 0
    %1001 = vmatpush1.bf16.msra.mxu0 %v726
    %1002 = vmatprep.subr.bf16.mxu0 0
    %1003 = vmatpush1.bf16.msra.mxu0 %v727
    %1004 = vmatprep.subr.bf16.mxu0 0
    %1005 = vmatpush1.bf16.msra.mxu0 %v728
    %1006 = vmatprep.subr.bf16.mxu0 0
    %1007 = vmatpush1.bf16.msra.mxu0 %v729
    %1008 = vmatprep.subr.bf16.mxu0 0
    %1009 = vmatpush1.bf16.msra.mxu0 %v730
    %1010 = vmatprep.subr.bf16.mxu0 0
    %1011 = vmatpush1.bf16.msra.mxu0 %v731
    %1012 = vmatprep.subr.bf16.mxu0 0
    %1013 = vmatpush1.bf16.msra.mxu0 %v732
    %1014 = vmatprep.subr.bf16.mxu0 0
    %1015 = vmatpush1.bf16.msra.mxu0 %v733
    %1016 = vmatprep.subr.bf16.mxu0 0
    %1017 = vmatpush1.bf16.msra.mxu0 %v734
    %1018 = vmatprep.subr.bf16.mxu0 0
    %1019 = vmatpush1.bf16.msra.mxu0 %v735
    %1020 = vmatprep.mubr.bf16.mxu0 %v266
    %1021 = vmatmul.mubr.bf16.gmra.mrb[0].mxu0 %v264
    %v1022 = vpop.f32.mrb[0].mxu0
    %v1023 = vadd.f32 %v983, %v1022
    %v1024 = vpop.f32.mrb[0].mxu0
    %v1025 = vpop.f32.mrb[0].mxu0
    %v1026 = vpop.f32.mrb[0].mxu0
    %1027 = vdwg.mxu0
    %1028 = vmatprep.subr.bf16.mxu0 0
    %1029 = vmatpush1.bf16.msra.mxu0 %v736
    %1030 = vmatprep.subr.bf16.mxu0 0
    %1031 = vmatpush1.bf16.msra.mxu0 %v737
    %1032 = vmatprep.subr.bf16.mxu0 0
    %1033 = vmatpush1.bf16.msra.mxu0 %v738
    %1034 = vmatprep.subr.bf16.mxu0 0
    %1035 = vmatpush1.bf16.msra.mxu0 %v739
    %1036 = vmatprep.subr.bf16.mxu0 0
    %1037 = vmatpush1.bf16.msra.mxu0 %v740
    %1038 = vmatprep.subr.bf16.mxu0 0
    %1039 = vmatpush1.bf16.msra.mxu0 %v741
    %1040 = vmatprep.subr.bf16.mxu0 0
    %1041 = vmatpush1.bf16.msra.mxu0 %v742
    %1042 = vmatprep.subr.bf16.mxu0 0
    %1043 = vmatpush1.bf16.msra.mxu0 %v743
    %1044 = vmatprep.subr.bf16.mxu0 0
    %1045 = vmatpush1.bf16.msra.mxu0 %v744
    %1046 = vmatprep.subr.bf16.mxu0 0
    %1047 = vmatpush1.bf16.msra.mxu0 %v745
    %1048 = vmatprep.subr.bf16.mxu0 0
    %1049 = vmatpush1.bf16.msra.mxu0 %v746
    %1050 = vmatprep.subr.bf16.mxu0 0
    %1051 = vmatpush1.bf16.msra.mxu0 %v747
    %1052 = vmatprep.subr.bf16.mxu0 0
    %1053 = vmatpush1.bf16.msra.mxu0 %v748
    %1054 = vmatprep.subr.bf16.mxu0 0
    %1055 = vmatpush1.bf16.msra.mxu0 %v749
    %1056 = vmatprep.subr.bf16.mxu0 0
    %1057 = vmatpush1.bf16.msra.mxu0 %v750
    %1058 = vmatprep.subr.bf16.mxu0 0
    %1059 = vmatpush1.bf16.msra.mxu0 %v751
    %1060 = vmatprep.mubr.bf16.mxu0 %v288
    %1061 = vmatmul.mubr.bf16.gmra.mrb[0].mxu0 %v281
    %v1062 = vpop.f32.mrb[0].mxu0
    %v1063 = vadd.f32 %v1023, %v1062
    %v1064 = vpop.f32.mrb[0].mxu0
    %v1065 = vpop.f32.mrb[0].mxu0
    %v1066 = vpop.f32.mrb[0].mxu0
    %1067 = vdwg.mxu0
    %1068 = vmatprep.subr.bf16.mxu0 0
    %1069 = vmatpush1.bf16.msra.mxu0 %v752
    %1070 = vmatprep.subr.bf16.mxu0 0
    %1071 = vmatpush1.bf16.msra.mxu0 %v753
    %1072 = vmatprep.subr.bf16.mxu0 0
    %1073 = vmatpush1.bf16.msra.mxu0 %v754
    %1074 = vmatprep.subr.bf16.mxu0 0
    %1075 = vmatpush1.bf16.msra.mxu0 %v755
    %1076 = vmatprep.subr.bf16.mxu0 0
    %1077 = vmatpush1.bf16.msra.mxu0 %v756
    %1078 = vmatprep.subr.bf16.mxu0 0
    %1079 = vmatpush1.bf16.msra.mxu0 %v757
    %1080 = vmatprep.subr.bf16.mxu0 0
    %1081 = vmatpush1.bf16.msra.mxu0 %v758
    %1082 = vmatprep.subr.bf16.mxu0 0
    %1083 = vmatpush1.bf16.msra.mxu0 %v759
    %1084 = vmatprep.subr.bf16.mxu0 0
    %1085 = vmatpush1.bf16.msra.mxu0 %v760
    %1086 = vmatprep.subr.bf16.mxu0 0
    %1087 = vmatpush1.bf16.msra.mxu0 %v761
    %1088 = vmatprep.subr.bf16.mxu0 0
    %1089 = vmatpush1.bf16.msra.mxu0 %v762
    %1090 = vmatprep.subr.bf16.mxu0 0
    %1091 = vmatpush1.bf16.msra.mxu0 %v763
    %1092 = vmatprep.subr.bf16.mxu0 0
    %1093 = vmatpush1.bf16.msra.mxu0 %v866
    %1094 = vmatprep.subr.bf16.mxu0 0
    %1095 = vmatpush1.bf16.msra.mxu0 0
    %1096 = vmatprep.subr.bf16.mxu0 0
    %1097 = vmatpush1.bf16.msra.mxu0 0
    %1098 = vmatprep.subr.bf16.mxu0 0
    %1099 = vmatpush1.bf16.msra.mxu0 0
    %1100 = vmatprep.mubr.bf16.mxu0 %v859
    %1101 = vmatmul.mubr.bf16.gmra.mrb[0].mxu0 %v289
    %v1102 = vpop.f32.mrb[0].mxu0
    %v1103 = vadd.f32 %v1063, %v1102
    %v1104 = vpop.f32.mrb[0].mxu0
    %v1105 = vpop.f32.mrb[0].mxu0
    %v1106 = vpop.f32.mrb[0].mxu0
    %1107 = vdwg.mxu0
    %v1108 = vxor.u32 %v1103, 2147483648
    %v1109 = vmul.f32 %v1108, 1.442695
    %v1110 = vpow.pop %v1109
    %v1111 = vadd.f32 %v1110, 1.0
    %v1112 = vrcp.pop %v1111
    %v1113 = vmul.f32 1.0, %v1112
    %v1114 = vtanh.pop %v1103
    %1116 = vrot.lane.b32.xlu0 %v1114, 48
    %v1117 = vpop.permute.xlu0 %1116
    %v1119 = vmul.f32 %v1113, %v1117
    %v1120 = vtanh.pop %v1119
    %1122 = vrot.lane.b32.xlu0 %v1120, 40
    %v1123 = vpop.permute.xlu0 %1122
    %v1125 = vmul.f32 %v1113, %v1123
    %v1126 = vld [vmem:[%s3] sm:$0xff]
    %v1127 = vld [vmem:[%s3 + $0x8] sm:$0xff]
    %v1128 = vld [vmem:[%s3 + $0x10] sm:$0xff]
    %v1129 = vld [vmem:[%s3 + $0x18] sm:$0xff]
    %v1130 = vld [vmem:[%s3 + $0x20] sm:$0xff]
    %v1131 = vld [vmem:[%s4] sm:$0x1]
    %v1133 = vlaneseq
    %v1134 = vshrl.u32 %v1133, 7
    %v1135 = vsub.s32 0, %v1134
    %v1136 = vrot.slane %v1131, %v1135
    %1139 = vrot.lane.b32.xlu0 %v1125, 88
    %v1140 = vpop.permute.xlu0 %1139
    %vm1141 = vcmask 326656
    %v1142 = vsel %vm1141, %v1140, 0
    %1144 = vmatprep.subr.mxu0 0.0
    %1145 = vmatpush1.msra.mxu0 %v1126
    %1146 = vmatprep.subr.mxu0 0.0
    %1147 = vmatpush1.msra.mxu0 %v1127
    %1148 = vmatprep.subr.mxu0 0.0
    %1149 = vmatpush1.msra.mxu0 %v1128
    %1150 = vmatprep.subr.mxu0 0.0
    %1151 = vmatpush1.msra.mxu0 %v1129
    %1152 = vmatprep.subr.mxu0 0.0
    %1153 = vmatpush1.msra.mxu0 %v1130
    %1154 = vmatprep.subr.mxu0 0.0
    %1155 = vmatpush1.msra.mxu0 0.0
    %1156 = vmatprep.subr.mxu0 0.0
    %1157 = vmatpush1.msra.mxu0 0.0
    %1158 = vmatprep.subr.mxu0 0.0
    %1159 = vmatpush1.msra.mxu0 0.0
    %1160 = vmatprep.subr.mxu0 0.0
    %1161 = vmatpush1.msra.mxu0 0.0
    %1162 = vmatprep.subr.mxu0 0.0
    %1163 = vmatpush1.msra.mxu0 0.0
    %1164 = vmatprep.subr.mxu0 0.0
    %1165 = vmatpush1.msra.mxu0 0.0
    %1166 = vmatprep.subr.mxu0 0.0
    %1167 = vmatpush1.msra.mxu0 0.0
    %1168 = vmatprep.subr.mxu0 0.0
    %1169 = vmatpush1.msra.mxu0 0.0
    %1170 = vmatprep.subr.mxu0 0.0
    %1171 = vmatpush1.msra.mxu0 0.0
    %1172 = vmatprep.subr.mxu0 0.0
    %1173 = vmatpush1.msra.mxu0 0.0
    %1174 = vmatprep.subr.mxu0 0.0
    %1175 = vmatpush1.msra.mxu0 0.0
    %1176 = vmatprep.subr.mxu0 0.0
    %1177 = vmatpush1.msra.mxu0 0.0
    %1178 = vmatprep.subr.mxu0 0.0
    %1179 = vmatpush1.msra.mxu0 0.0
    %1180 = vmatprep.subr.mxu0 0.0
    %1181 = vmatpush1.msra.mxu0 0.0
    %1182 = vmatprep.subr.mxu0 0.0
    %1183 = vmatpush1.msra.mxu0 0.0
    %1184 = vmatprep.subr.mxu0 0.0
    %1185 = vmatpush1.msra.mxu0 0.0
    %1186 = vmatprep.subr.mxu0 0.0
    %1187 = vmatpush1.msra.mxu0 0.0
    %1188 = vmatprep.subr.mxu0 0.0
    %1189 = vmatpush1.msra.mxu0 0.0
    %1190 = vmatprep.subr.mxu0 0.0
    %1191 = vmatpush1.msra.mxu0 0.0
    %1192 = vmatprep.subr.mxu0 0.0
    %1193 = vmatpush1.msra.mxu0 0.0
    %1194 = vmatprep.subr.mxu0 0.0
    %1195 = vmatpush1.msra.mxu0 0.0
    %1196 = vmatprep.subr.mxu0 0.0
    %1197 = vmatpush1.msra.mxu0 0.0
    %1198 = vmatprep.subr.mxu0 0.0
    %1199 = vmatpush1.msra.mxu0 0.0
    %1200 = vmatprep.subr.mxu0 0.0
    %1201 = vmatpush1.msra.mxu0 0.0
    %1202 = vmatprep.subr.mxu0 0.0
    %1203 = vmatpush1.msra.mxu0 0.0
    %1204 = vmatprep.subr.mxu0 0.0
    %1205 = vmatpush1.msra.mxu0 0.0
    %1206 = vmatprep.subr.mxu0 0.0
    %1207 = vmatpush1.msra.mxu0 0.0
    %1208 = vmatprep.mubr.f32.mxu0 0.0
    %1209 = vmatmul.mubr.f32.gmra.mrb[0].mxu0 %v1142
    %v1210 = vpop.f32.mrb[0].mxu0
    %v1211 = vadd.f32 %v1136, %v1210
    %v1212 = vpop.f32.mrb[0].mxu0
    %1213 = vdwg.mxu0
    %vm1214 = vcmask 402432
    %1215 = vst.msk [vmem:[#allocation2] sm:$0x3] %vm1214, %v1211
    // Predicated region
    $region22: #{tpu_custom_call.1} parent=1 // pred_check
      _
    $region23: #{tpu_custom_call.1} parent=1 // pred_check_branch
      %1217 = sbr.rel (0) target = $region25
    $region24: #{tpu_custom_call.1} parent=1 // pred_region
      %s1219 = ssub.s32 32, 32
      %1220 = vsyncadd [#allocation3], %s1219
      %s1222 = sshll.u32 [#allocation2], 4
      %s1223 = int_to_ptr.vmem [resolvable:$true] %s1222
      %1225 = dma.vmem_to_hbm [thread:$0]  %s1223, 32, %s5, [#allocation3]
    $region25: #{tpu_custom_call.1} parent=1 // pred_fallthru
      _
    // Predicated region
    $region26: #{tpu_custom_call.1} parent=1 // pred_check
      _
    $region27: #{tpu_custom_call.1} parent=1 // pred_check_branch
      %1227 = sbr.rel (0) target = $region29
    $region28: #{tpu_custom_call.1} parent=1 // pred_region
      %1228 = dma.done [#allocation3], 32
    $region29: #{tpu_custom_call.1} parent=1 // pred_fallthru
      _
    %1229 = vsyncpa [#allocation3], 1

</llo_original>
